<compile_context>
chip_gen: v5e
topology: v5e:2x2
jax: 0.10.0
libtpu: 0.0.40
codegen_flags: <defaults>
</compile_context>

<pallas_src>
import numpy as np
import jax
import jax.numpy as jnp
from jax.experimental import pallas as pl
from jax.experimental.pallas import tpu as pltpu


# ----------------------------------------------------------------------------
# Fused Pallas kernel: all GCN layers + ELU + Linear head for one graph / grid step
# ----------------------------------------------------------------------------
def make_regress_node_kernel(num_layers):
    def kernel(*refs):
        # refs = (a_ref, x_ref, w1, b1, ..., wL, bL, lt1_w, lt1_b, out_ref)
        a_ref, x_ref = refs[0], refs[1]
        o_ref = refs[-1]
        p = refs[2:-1]

        a = a_ref[0]                          # [N, N]  normalized adjacency
        h = x_ref[0]                          # [N, F]  node features
        for l in range(num_layers):
            w = p[2 * l][...]                 # [Din, H]
            b = p[2 * l + 1][...]             # [1, H]
            # aggregate-then-transform: (A @ H) @ W  ==  A @ (H @ W), cheaper for Din<=H
            ah = jnp.dot(a, h, preferred_element_type=jnp.float32)
            h = jnp.dot(ah, w, preferred_element_type=jnp.float32) + b
            # ELU (alpha=1); dropout in eval mode is the identity.
            h = jnp.where(h > 0.0, h, jnp.exp(h) - 1.0)
        w_out = p[-2][...]                    # [H, 1]
        b_out = p[-1][...]                    # [1, 1]
        o_ref[0] = jnp.dot(h, w_out, preferred_element_type=jnp.float32) + b_out

    return kernel


# ----------------------------------------------------------------------------
# Wrapper: single pallas_call over a grid of graphs
# ----------------------------------------------------------------------------
def regress_node_forward(a_norm, x, params):
    """a_norm: [G, N, N], x: [G, N, F]  ->  [G, N, 1] (per-node regression)."""
    G, N, F = x.shape
    conv = params["conv"]
    num_layers = len(conv)

    flat_params = []
    in_specs = [
        pl.BlockSpec((1, N, N), lambda g: (g, 0, 0)),   # per-graph A_hat
        pl.BlockSpec((1, N, F), lambda g: (g, 0, 0)),   # per-graph X
    ]
    for (w, b) in conv:
        flat_params += [w, b]
        in_specs += [
            pl.BlockSpec(w.shape, lambda g: (0, 0)),    # shared weight (stays resident)
            pl.BlockSpec(b.shape, lambda g: (0, 0)),    # shared bias
        ]
    flat_params += [params["lt1_w"], params["lt1_b"]]
    in_specs += [
        pl.BlockSpec(params["lt1_w"].shape, lambda g: (0, 0)),
        pl.BlockSpec(params["lt1_b"].shape, lambda g: (0, 0)),
    ]

    return pl.pallas_call(
        make_regress_node_kernel(num_layers),
        out_shape=jax.ShapeDtypeStruct((G, N, 1), jnp.float32),
        grid=(G,),
        in_specs=in_specs,
        out_specs=pl.BlockSpec((1, N, 1), lambda g: (g, 0, 0)),
        compiler_params=pltpu.CompilerParams(
            dimension_semantics=("parallel",)),   # v7x: split graphs across TCs
    )(a_norm, x, *flat_params)


# ----------------------------------------------------------------------------
# Host-side glue: dense GCN normalization, parameter init, pure-JAX reference
# ----------------------------------------------------------------------------
def build_norm_adj(edge_index, num_nodes):
    """Dense D^-1/2 (A + I) D^-1/2 (GCNConv normalization with self-loops)."""
    A = np.zeros((num_nodes, num_nodes), dtype=np.float32)
    A[edge_index[0], edge_index[1]] = 1.0
    A = A + np.eye(num_nodes, dtype=np.float32)
    deg = A.sum(axis=1)
    dinv = 1.0 / np.sqrt(np.maximum(deg, 1e-12))
    return (dinv[:, None] * A) * dinv[None, :]


def init_params(key, num_features, hidden, num_layers):
    conv = []
    dims = [num_features] + [hidden] * num_layers
    for i in range(num_layers):
        key, kw = jax.random.split(key)
        fan_in, fan_out = dims[i], dims[i + 1]
        scale = float(np.sqrt(2.0 / (fan_in + fan_out)))
        w = scale * jax.random.normal(kw, (fan_in, fan_out), dtype=jnp.float32)
        b = jnp.zeros((1, fan_out), dtype=jnp.float32)          # kept 2D for the kernel
        conv.append((w, b))
    key, kw, kb = jax.random.split(key, 3)
    scale = float(np.sqrt(1.0 / hidden))
    lt1_w = scale * jax.random.normal(kw, (hidden, 1), dtype=jnp.float32)
    lt1_b = 0.1 * jax.random.normal(kb, (1, 1), dtype=jnp.float32)
    return {"conv": conv, "lt1_w": lt1_w, "lt1_b": lt1_b}


def regress_node_reference(a_norm, x, params):
    """Pure-JAX reference (same math, same contraction order) for validation."""
    h = x
    for (w, b) in params["conv"]:
        h = jnp.einsum("gij,gjf->gif", a_norm, h)
        h = jnp.matmul(h, w) + b
        h = jnp.where(h > 0.0, h, jnp.exp(h) - 1.0)
    return jnp.matmul(h, params["lt1_w"]) + params["lt1_b"]


# ----------------------------------------------------------------------------
# Example run
# ----------------------------------------------------------------------------
if __name__ == "__main__":
    NUM_FEATURES = 4
    HIDDEN = 32
    NUM_LAYERS = 2
    NUM_GRAPHS = 2
    NODES = 16

    key = jax.random.PRNGKey(0)
    key, kp = jax.random.split(key)
    params = init_params(kp, NUM_FEATURES, HIDDEN, NUM_LAYERS)

    rng = np.random.RandomState(0)
    a_list, x_list = [], []
    for _ in range(NUM_GRAPHS):
        key, kx = jax.random.split(key)
        x_list.append(jax.random.normal(kx, (NODES, NUM_FEATURES), dtype=jnp.float32))
        # deterministic ring + a few random extra undirected edges
        src = np.arange(NODES)
        dst = (src + 1) % NODES
        es = rng.randint(0, NODES, size=8)
        ed = rng.randint(0, NODES, size=8)
        ei = np.stack([np.concatenate([src, dst, es, ed]),
                       np.concatenate([dst, src, ed, es])])
        a_list.append(build_norm_adj(ei, NODES))

    a_norm = jnp.asarray(np.stack(a_list))          # [G, N, N]
    x = jnp.stack(x_list)                           # [G, N, F]

    out = regress_node_forward(a_norm, x, params)   # single fused pallas_call
    out = jax.block_until_ready(out)

    ref = regress_node_reference(a_norm, x, params)
    assert out.shape == (NUM_GRAPHS, NODES, 1)
    assert np.allclose(np.asarray(out), np.asarray(ref), atol=1e-3, rtol=1e-3)
    print("KERNEL_OK")
</pallas_src>

<mosaic_0001>
module attributes {stable_mosaic.version = 11 : i64} {
  func.func @kernel(%arg0: i32, %arg1: memref<1x16x16xf32, #tpu.memory_space<vmem>>, %arg2: memref<1x16x4xf32, #tpu.memory_space<vmem>>, %arg3: memref<4x32xf32, #tpu.memory_space<vmem>>, %arg4: memref<1x32xf32, #tpu.memory_space<vmem>>, %arg5: memref<32x32xf32, #tpu.memory_space<vmem>>, %arg6: memref<1x32xf32, #tpu.memory_space<vmem>>, %arg7: memref<32x1xf32, #tpu.memory_space<vmem>>, %arg8: memref<1x1xf32, #tpu.memory_space<vmem>>, %arg9: memref<1x16x1xf32, #tpu.memory_space<vmem>>) attributes {dimension_semantics = [#tpu.dimension_semantics<parallel>], iteration_bounds = array<i64: 2>, scalar_prefetch = 0 : i64, scratch_operands = 0 : i64, tpu.core_type = #tpu.core_type<tc>, window_params = [{transform_indices = @transform_0, window_bounds = array<i64: 1, 16, 16>}, {transform_indices = @transform_1, window_bounds = array<i64: 1, 16, 4>}, {pipeline_mode = #tpu.pipeline_mode<synchronous>, transform_indices = @transform_2, window_bounds = array<i64: 4, 32>}, {pipeline_mode = #tpu.pipeline_mode<synchronous>, transform_indices = @transform_3, window_bounds = array<i64: 1, 32>}, {pipeline_mode = #tpu.pipeline_mode<synchronous>, transform_indices = @transform_4, window_bounds = array<i64: 32, 32>}, {pipeline_mode = #tpu.pipeline_mode<synchronous>, transform_indices = @transform_5, window_bounds = array<i64: 1, 32>}, {pipeline_mode = #tpu.pipeline_mode<synchronous>, transform_indices = @transform_6, window_bounds = array<i64: 32, 1>}, {pipeline_mode = #tpu.pipeline_mode<synchronous>, transform_indices = @transform_7, window_bounds = array<i64: 1, 1>}, {transform_indices = @transform_8, window_bounds = array<i64: 1, 16, 1>}]} {
    %c0 = arith.constant 0 : index
    %c0_0 = arith.constant 0 : index
    %c0_1 = arith.constant 0 : index
    %0 = vector.load %arg1[%c0, %c0_0, %c0_1] : memref<1x16x16xf32, #tpu.memory_space<vmem>>, vector<1x16x16xf32>
    %1 = vector.shape_cast %0 : vector<1x16x16xf32> to vector<16x16xf32>
    %c0_2 = arith.constant 0 : index
    %c0_3 = arith.constant 0 : index
    %c0_4 = arith.constant 0 : index
    %2 = vector.load %arg2[%c0_2, %c0_3, %c0_4] : memref<1x16x4xf32, #tpu.memory_space<vmem>>, vector<1x16x4xf32>
    %3 = vector.shape_cast %2 : vector<1x16x4xf32> to vector<16x4xf32>
    %c0_5 = arith.constant 0 : index
    %c0_6 = arith.constant 0 : index
    %4 = vector.load %arg3[%c0_5, %c0_6] : memref<4x32xf32, #tpu.memory_space<vmem>>, vector<4x32xf32>
    %c0_7 = arith.constant 0 : index
    %c0_8 = arith.constant 0 : index
    %5 = vector.load %arg4[%c0_7, %c0_8] : memref<1x32xf32, #tpu.memory_space<vmem>>, vector<1x32xf32>
    %cst = arith.constant dense<0.000000e+00> : vector<16x4xf32>
    %6 = tpu.matmul %1, %3, %cst {dimension_numbers = #tpu.dot_dimension_numbers<[1], [0], [0], [1], [0, 0, 1, 1], [], []>} : vector<16x16xf32>, vector<16x4xf32>, vector<16x4xf32> -> vector<16x4xf32>
    %cst_9 = arith.constant dense<0.000000e+00> : vector<16x32xf32>
    %7 = tpu.matmul %6, %4, %cst_9 {dimension_numbers = #tpu.dot_dimension_numbers<[1], [0], [0], [1], [0, 0, 1, 1], [], []>} : vector<16x4xf32>, vector<4x32xf32>, vector<16x32xf32> -> vector<16x32xf32>
    %8 = vector.broadcast %5 : vector<1x32xf32> to vector<16x32xf32>
    %9 = arith.addf %7, %8 : vector<16x32xf32>
    %cst_10 = arith.constant 0.000000e+00 : f32
    %10 = vector.broadcast %cst_10 : f32 to vector<16x32xf32>
    %11 = arith.cmpf ogt, %9, %10 : vector<16x32xf32>
    %12 = math.exp %9 : vector<16x32xf32>
    %cst_11 = arith.constant 1.000000e+00 : f32
    %13 = vector.broadcast %cst_11 : f32 to vector<16x32xf32>
    %14 = arith.subf %12, %13 : vector<16x32xf32>
    %15 = arith.select %11, %9, %14 : vector<16x32xi1>, vector<16x32xf32>
    %c0_12 = arith.constant 0 : index
    %c0_13 = arith.constant 0 : index
    %16 = vector.load %arg5[%c0_12, %c0_13] : memref<32x32xf32, #tpu.memory_space<vmem>>, vector<32x32xf32>
    %c0_14 = arith.constant 0 : index
    %c0_15 = arith.constant 0 : index
    %17 = vector.load %arg6[%c0_14, %c0_15] : memref<1x32xf32, #tpu.memory_space<vmem>>, vector<1x32xf32>
    %cst_16 = arith.constant dense<0.000000e+00> : vector<16x32xf32>
    %18 = tpu.matmul %1, %15, %cst_16 {dimension_numbers = #tpu.dot_dimension_numbers<[1], [0], [0], [1], [0, 0, 1, 1], [], []>} : vector<16x16xf32>, vector<16x32xf32>, vector<16x32xf32> -> vector<16x32xf32>
    %cst_17 = arith.constant dense<0.000000e+00> : vector<16x32xf32>
    %19 = tpu.matmul %18, %16, %cst_17 {dimension_numbers = #tpu.dot_dimension_numbers<[1], [0], [0], [1], [0, 0, 1, 1], [], []>} : vector<16x32xf32>, vector<32x32xf32>, vector<16x32xf32> -> vector<16x32xf32>
    %20 = vector.broadcast %17 : vector<1x32xf32> to vector<16x32xf32>
    %21 = arith.addf %19, %20 : vector<16x32xf32>
    %cst_18 = arith.constant 0.000000e+00 : f32
    %22 = vector.broadcast %cst_18 : f32 to vector<16x32xf32>
    %23 = arith.cmpf ogt, %21, %22 : vector<16x32xf32>
    %24 = math.exp %21 : vector<16x32xf32>
    %cst_19 = arith.constant 1.000000e+00 : f32
    %25 = vector.broadcast %cst_19 : f32 to vector<16x32xf32>
    %26 = arith.subf %24, %25 : vector<16x32xf32>
    %27 = arith.select %23, %21, %26 : vector<16x32xi1>, vector<16x32xf32>
    %c0_20 = arith.constant 0 : index
    %c0_21 = arith.constant 0 : index
    %28 = vector.load %arg7[%c0_20, %c0_21] : memref<32x1xf32, #tpu.memory_space<vmem>>, vector<32x1xf32>
    %c0_22 = arith.constant 0 : index
    %c0_23 = arith.constant 0 : index
    %29 = vector.load %arg8[%c0_22, %c0_23] : memref<1x1xf32, #tpu.memory_space<vmem>>, vector<1x1xf32>
    %cst_24 = arith.constant dense<0.000000e+00> : vector<16x1xf32>
    %30 = tpu.matmul %27, %28, %cst_24 {dimension_numbers = #tpu.dot_dimension_numbers<[1], [0], [0], [1], [0, 0, 1, 1], [], []>} : vector<16x32xf32>, vector<32x1xf32>, vector<16x1xf32> -> vector<16x1xf32>
    %31 = vector.broadcast %29 : vector<1x1xf32> to vector<16x1xf32>
    %32 = arith.addf %30, %31 : vector<16x1xf32>
    %c0_25 = arith.constant 0 : index
    %c0_26 = arith.constant 0 : index
    %c0_27 = arith.constant 0 : index
    %33 = vector.load %arg9[%c0_25, %c0_26, %c0_27] : memref<1x16x1xf32, #tpu.memory_space<vmem>>, vector<1x16x1xf32>
    %34 = vector.shape_cast %33 : vector<1x16x1xf32> to vector<16x1xf32>
    %35 = vector.shape_cast %32 : vector<16x1xf32> to vector<1x16x1xf32>
    tpu.vector_store %arg9[%c0_25, %c0_26, %c0_27], %35 {strides = array<i32>} : memref<1x16x1xf32, #tpu.memory_space<vmem>>, vector<1x16x1xf32>,
    return
  }
  func.func @transform_0(%arg0: i32) -> (i32, i32, i32) {
    %c0_i32 = arith.constant 0 : i32
    %c0_i32_0 = arith.constant 0 : i32
    %c0_i32_1 = arith.constant 0 : i32
    return %arg0, %c0_i32, %c0_i32_0 : i32, i32, i32
  }
  func.func @transform_1(%arg0: i32) -> (i32, i32, i32) {
    %c0_i32 = arith.constant 0 : i32
    %c0_i32_0 = arith.constant 0 : i32
    %c0_i32_1 = arith.constant 0 : i32
    return %arg0, %c0_i32, %c0_i32_0 : i32, i32, i32
  }
  func.func @transform_2(%arg0: i32) -> (i32, i32) {
    %c0_i32 = arith.constant 0 : i32
    %c0_i32_0 = arith.constant 0 : i32
    %c0_i32_1 = arith.constant 0 : i32
    return %c0_i32, %c0_i32_0 : i32, i32
  }
  func.func @transform_3(%arg0: i32) -> (i32, i32) {
    %c0_i32 = arith.constant 0 : i32
    %c0_i32_0 = arith.constant 0 : i32
    %c0_i32_1 = arith.constant 0 : i32
    return %c0_i32, %c0_i32_0 : i32, i32
  }
  func.func @transform_4(%arg0: i32) -> (i32, i32) {
    %c0_i32 = arith.constant 0 : i32
    %c0_i32_0 = arith.constant 0 : i32
    %c0_i32_1 = arith.constant 0 : i32
    return %c0_i32, %c0_i32_0 : i32, i32
  }
  func.func @transform_5(%arg0: i32) -> (i32, i32) {
    %c0_i32 = arith.constant 0 : i32
    %c0_i32_0 = arith.constant 0 : i32
    %c0_i32_1 = arith.constant 0 : i32
    return %c0_i32, %c0_i32_0 : i32, i32
  }
  func.func @transform_6(%arg0: i32) -> (i32, i32) {
    %c0_i32 = arith.constant 0 : i32
    %c0_i32_0 = arith.constant 0 : i32
    %c0_i32_1 = arith.constant 0 : i32
    return %c0_i32, %c0_i32_0 : i32, i32
  }
  func.func @transform_7(%arg0: i32) -> (i32, i32) {
    %c0_i32 = arith.constant 0 : i32
    %c0_i32_0 = arith.constant 0 : i32
    %c0_i32_1 = arith.constant 0 : i32
    return %c0_i32, %c0_i32_0 : i32, i32
  }
  func.func @transform_8(%arg0: i32) -> (i32, i32, i32) {
    %c0_i32 = arith.constant 0 : i32
    %c0_i32_0 = arith.constant 0 : i32
    %c0_i32_1 = arith.constant 0 : i32
    return %arg0, %c0_i32, %c0_i32_0 : i32, i32, i32
  }
}

</mosaic_0001>

<llo_original>
// kernel: tpu_custom_call.1
$region0: #{tpu_custom_call.1}
  #allocation0 [shape = 'u32[]', space=smem, size = 0x4, offset = 0x4, fixed_abs, tag = 'smem constant byte address 0x4 - core index']
  #allocation1 [shape = 'u32[72,128]{1,0:T(1,128)}', space=vmem, size = 0x9000, scoped, tag = 'internal scratch']
  #allocation2 [shape = 'f32[1,1]{1,0:T(1,128)S(1)}', space=vmem, size = 0x200, scoped, tag = 'scoped memory for tpu_custom_call.1']
  %s0 = inlined_call_operand.vmem [shape: f32[2,16,16], index: 0, kind: input, shape index: {}]
  %s1 = inlined_call_operand.vmem [shape: f32[2,16,4], index: 1, kind: input, shape index: {}]
  %s2 = inlined_call_operand.vmem [shape: f32[4,32], index: 2, kind: input, shape index: {}]
  %s3 = inlined_call_operand.vmem [shape: f32[1,32], index: 3, kind: input, shape index: {}]
  %s4 = inlined_call_operand.vmem [shape: f32[32,32], index: 4, kind: input, shape index: {}]
  %s5 = inlined_call_operand.vmem [shape: f32[1,32], index: 5, kind: input, shape index: {}]
  %s6 = inlined_call_operand.vmem [shape: f32[32,1], index: 6, kind: input, shape index: {}]
  %s7 = inlined_call_operand.<no memory space> [shape: f32[1,1], index: 7, kind: input, shape index: {}]
  %s8 = inlined_call_operand.vmem [shape: f32[2,16,1], index: 8, kind: output, shape index: {}]
  %s9 = sld [smem:[#allocation0]]
  $region65: #{tpu_custom_call.1} parent=0
    _
  %s11 = ssub.s32 1, %s9
  %s12 = scalar_select 0, %s11, %s9
  %v13 = vstv %s7
  %14 = vst [vmem:[#allocation2] sm:$0x1] %v13
  loop: start=0, step=1, limit=4
  $region2: #{tpu_custom_call.1} parent=0 // loop_pre_header
    _
  $region3: #{tpu_custom_call.1} parent=0 // loop_header
    %s16 = sphi 0, %s20
    %p17 = scmp.ge.s32.totalorder %s16, 4
    %s26 = sphi 0, %s28
    %s29 = sphi 0, %s26
    %s30 = sphi 0, %s29
    %s46 = sphi 0, %s30
    %s52 = sphi 0, %s54
    %s55 = sphi 0, %s52
    %s56 = sphi 0, %s55
    %s72 = sphi 0, %s56
    %s76 = sphi 0, %s76
    %s78 = sphi 0, %s76
    %s79 = sphi 0, %s78
    %s93 = sphi 0, %s79
    %s97 = sphi 0, %s97
    %s99 = sphi 0, %s97
    %s100 = sphi 0, %s99
    %s114 = sphi 0, %s100
    %s118 = sphi 0, %s118
    %s120 = sphi 0, %s118
    %s121 = sphi 0, %s120
    %s135 = sphi 0, %s121
    %s139 = sphi 0, %s139
    %s141 = sphi 0, %s139
    %s142 = sphi 0, %s141
    %s156 = sphi 0, %s142
    %s160 = sphi 0, %s160
    %s162 = sphi 0, %s160
    %s163 = sphi 0, %s162
    %s177 = sphi 0, %s163
    %s181 = sphi 0, %s181
    %s183 = sphi 0, %s181
    %s184 = sphi 0, %s183
    %s198 = sphi 0, %s184
    %s204 = sphi 0, %s206
    %s207 = sphi 0, %s204
    %s208 = sphi 0, %s207
    %s224 = sphi 0, %s208
  $region4: #{tpu_custom_call.1} parent=0 // loop_header_branch
    %19 = sbr.rel (%p17) target = $region8
  $region5: #{tpu_custom_call.1} parent=0 // loop_body
    %s21 = ssub.s32 %s16, 1
    %s22 = ssub.s32 %s16, 2
    %s23 = sadd.s32 %s16, 1
    %s24 = ssub.s32 %s16, %s23
    %p25 = scmp.eq.s32.totalorder %s24, 0
    %s27 = sadd.s32 %s26, 1
    %s28 = scalar_select %p25, %s26, %s27
    %p31 = pneg %p25
    %p32 = scmp.eq.s32.totalorder %s16, 1
    %p33 = por %p31, %p32
    %p34 = scmp.ne.s32.totalorder %s26, %s29
    %p35 = scmp.eq.s32.totalorder %s16, 0
    %p36 = por %p34, %p35
    %p37 = scmp.ne.s32.totalorder %s26, %s29
    %p38 = scmp.eq.s32.totalorder %s21, 1
    %p39 = por %p37, %p38
    %p40 = scmp.ne.s32.totalorder %s29, %s30
    %p41 = scmp.eq.s32.totalorder %s21, 0
    %p42 = por %p40, %p41
    %p43 = scmp.ne.s32.totalorder %s29, %s30
    %p44 = scmp.eq.s32.totalorder %s22, 1
    %p45 = por %p43, %p44
    %p47 = scmp.ne.s32.totalorder %s30, %s46
    %p48 = scmp.eq.s32.totalorder %s22, 0
    %p49 = por %p47, %p48
    %s50 = ssub.s32 %s16, %s23
    %p51 = scmp.eq.s32.totalorder %s50, 0
    %s53 = sadd.s32 %s52, 1
    %s54 = scalar_select %p51, %s52, %s53
    %p57 = pneg %p51
    %p58 = scmp.eq.s32.totalorder %s16, 1
    %p59 = por %p57, %p58
    %p60 = scmp.ne.s32.totalorder %s52, %s55
    %p61 = scmp.eq.s32.totalorder %s16, 0
    %p62 = por %p60, %p61
    %p63 = scmp.ne.s32.totalorder %s52, %s55
    %p64 = scmp.eq.s32.totalorder %s21, 1
    %p65 = por %p63, %p64
    %p66 = scmp.ne.s32.totalorder %s55, %s56
    %p67 = scmp.eq.s32.totalorder %s21, 0
    %p68 = por %p66, %p67
    %p69 = scmp.ne.s32.totalorder %s55, %s56
    %p70 = scmp.eq.s32.totalorder %s22, 1
    %p71 = por %p69, %p70
    %p73 = scmp.ne.s32.totalorder %s56, %s72
    %p74 = scmp.eq.s32.totalorder %s22, 0
    %p75 = por %p73, %p74
    %s77 = sadd.s32 %s76, 1
    %p80 = scmp.eq.s32.totalorder %s16, 1
    %p81 = scmp.ne.s32.totalorder %s76, %s78
    %p82 = scmp.eq.s32.totalorder %s16, 0
    %p83 = por %p81, %p82
    %p84 = scmp.ne.s32.totalorder %s76, %s78
    %p85 = scmp.eq.s32.totalorder %s21, 1
    %p86 = por %p84, %p85
    %p87 = scmp.ne.s32.totalorder %s78, %s79
    %p88 = scmp.eq.s32.totalorder %s21, 0
    %p89 = por %p87, %p88
    %p90 = scmp.ne.s32.totalorder %s78, %s79
    %p91 = scmp.eq.s32.totalorder %s22, 1
    %p92 = por %p90, %p91
    %p94 = scmp.ne.s32.totalorder %s79, %s93
    %p95 = scmp.eq.s32.totalorder %s22, 0
    %p96 = por %p94, %p95
    %s98 = sadd.s32 %s97, 1
    %p101 = scmp.eq.s32.totalorder %s16, 1
    %p102 = scmp.ne.s32.totalorder %s97, %s99
    %p103 = scmp.eq.s32.totalorder %s16, 0
    %p104 = por %p102, %p103
    %p105 = scmp.ne.s32.totalorder %s97, %s99
    %p106 = scmp.eq.s32.totalorder %s21, 1
    %p107 = por %p105, %p106
    %p108 = scmp.ne.s32.totalorder %s99, %s100
    %p109 = scmp.eq.s32.totalorder %s21, 0
    %p110 = por %p108, %p109
    %p111 = scmp.ne.s32.totalorder %s99, %s100
    %p112 = scmp.eq.s32.totalorder %s22, 1
    %p113 = por %p111, %p112
    %p115 = scmp.ne.s32.totalorder %s100, %s114
    %p116 = scmp.eq.s32.totalorder %s22, 0
    %p117 = por %p115, %p116
    %s119 = sadd.s32 %s118, 1
    %p122 = scmp.eq.s32.totalorder %s16, 1
    %p123 = scmp.ne.s32.totalorder %s118, %s120
    %p124 = scmp.eq.s32.totalorder %s16, 0
    %p125 = por %p123, %p124
    %p126 = scmp.ne.s32.totalorder %s118, %s120
    %p127 = scmp.eq.s32.totalorder %s21, 1
    %p128 = por %p126, %p127
    %p129 = scmp.ne.s32.totalorder %s120, %s121
    %p130 = scmp.eq.s32.totalorder %s21, 0
    %p131 = por %p129, %p130
    %p132 = scmp.ne.s32.totalorder %s120, %s121
    %p133 = scmp.eq.s32.totalorder %s22, 1
    %p134 = por %p132, %p133
    %p136 = scmp.ne.s32.totalorder %s121, %s135
    %p137 = scmp.eq.s32.totalorder %s22, 0
    %p138 = por %p136, %p137
    %s140 = sadd.s32 %s139, 1
    %p143 = scmp.eq.s32.totalorder %s16, 1
    %p144 = scmp.ne.s32.totalorder %s139, %s141
    %p145 = scmp.eq.s32.totalorder %s16, 0
    %p146 = por %p144, %p145
    %p147 = scmp.ne.s32.totalorder %s139, %s141
    %p148 = scmp.eq.s32.totalorder %s21, 1
    %p149 = por %p147, %p148
    %p150 = scmp.ne.s32.totalorder %s141, %s142
    %p151 = scmp.eq.s32.totalorder %s21, 0
    %p152 = por %p150, %p151
    %p153 = scmp.ne.s32.totalorder %s141, %s142
    %p154 = scmp.eq.s32.totalorder %s22, 1
    %p155 = por %p153, %p154
    %p157 = scmp.ne.s32.totalorder %s142, %s156
    %p158 = scmp.eq.s32.totalorder %s22, 0
    %p159 = por %p157, %p158
    %s161 = sadd.s32 %s160, 1
    %p164 = scmp.eq.s32.totalorder %s16, 1
    %p165 = scmp.ne.s32.totalorder %s160, %s162
    %p166 = scmp.eq.s32.totalorder %s16, 0
    %p167 = por %p165, %p166
    %p168 = scmp.ne.s32.totalorder %s160, %s162
    %p169 = scmp.eq.s32.totalorder %s21, 1
    %p170 = por %p168, %p169
    %p171 = scmp.ne.s32.totalorder %s162, %s163
    %p172 = scmp.eq.s32.totalorder %s21, 0
    %p173 = por %p171, %p172
    %p174 = scmp.ne.s32.totalorder %s162, %s163
    %p175 = scmp.eq.s32.totalorder %s22, 1
    %p176 = por %p174, %p175
    %p178 = scmp.ne.s32.totalorder %s163, %s177
    %p179 = scmp.eq.s32.totalorder %s22, 0
    %p180 = por %p178, %p179
    %s182 = sadd.s32 %s181, 1
    %p185 = scmp.eq.s32.totalorder %s16, 1
    %p186 = scmp.ne.s32.totalorder %s181, %s183
    %p187 = scmp.eq.s32.totalorder %s16, 0
    %p188 = por %p186, %p187
    %p189 = scmp.ne.s32.totalorder %s181, %s183
    %p190 = scmp.eq.s32.totalorder %s21, 1
    %p191 = por %p189, %p190
    %p192 = scmp.ne.s32.totalorder %s183, %s184
    %p193 = scmp.eq.s32.totalorder %s21, 0
    %p194 = por %p192, %p193
    %p195 = scmp.ne.s32.totalorder %s183, %s184
    %p196 = scmp.eq.s32.totalorder %s22, 1
    %p197 = por %p195, %p196
    %p199 = scmp.ne.s32.totalorder %s184, %s198
    %p200 = scmp.eq.s32.totalorder %s22, 0
    %p201 = por %p199, %p200
    %s202 = ssub.s32 %s16, %s23
    %p203 = scmp.eq.s32.totalorder %s202, 0
    %s205 = sadd.s32 %s204, 1
    %s206 = scalar_select %p203, %s204, %s205
    %p209 = pneg %p203
    %p210 = scmp.eq.s32.totalorder %s16, 1
    %p211 = por %p209, %p210
    %p212 = scmp.ne.s32.totalorder %s204, %s207
    %p213 = scmp.eq.s32.totalorder %s16, 0
    %p214 = por %p212, %p213
    %p215 = scmp.ne.s32.totalorder %s204, %s207
    %p216 = scmp.eq.s32.totalorder %s21, 1
    %p217 = por %p215, %p216
    %p218 = scmp.ne.s32.totalorder %s207, %s208
    %p219 = scmp.eq.s32.totalorder %s21, 0
    %p220 = por %p218, %p219
    %p221 = scmp.ne.s32.totalorder %s207, %s208
    %p222 = scmp.eq.s32.totalorder %s22, 1
    %p223 = por %p221, %p222
    %p225 = scmp.ne.s32.totalorder %s208, %s224
    %p226 = scmp.eq.s32.totalorder %s22, 0
    %p227 = por %p225, %p226
    %p228 = scmp.le.s32.totalorder 1, %s16
    %p229 = scmp.lt.s32.totalorder %s16, 3
    %p230 = pnand %p228, %p229
    %p231 = pneg %p230
    // Predicated region
    $region9: #{tpu_custom_call.1} parent=5 // pred_check
      _
    $region10: #{tpu_custom_call.1} parent=5 // pred_check_branch
      %233 = sbr.rel (%p230) target = $region12
    $region11: #{tpu_custom_call.1} parent=5 // pred_region
      %s234 = ssub.s32 %s16, 1
      // Predicated region
      $region13: #{tpu_custom_call.1} parent=11 // pred_check
        %p235 = pneg %p89
      $region14: #{tpu_custom_call.1} parent=11 // pred_check_branch
        %237 = sbr.rel (%p235) target = $region16
      $region15: #{tpu_custom_call.1} parent=11 // pred_region
        _
      $region16: #{tpu_custom_call.1} parent=11 // pred_fallthru
        _
      // Predicated region
      $region17: #{tpu_custom_call.1} parent=11 // pred_check
        %p238 = pneg %p110
      $region18: #{tpu_custom_call.1} parent=11 // pred_check_branch
        %240 = sbr.rel (%p238) target = $region20
      $region19: #{tpu_custom_call.1} parent=11 // pred_region
        _
      $region20: #{tpu_custom_call.1} parent=11 // pred_fallthru
        _
      // Predicated region
      $region21: #{tpu_custom_call.1} parent=11 // pred_check
        %p241 = pneg %p131
      $region22: #{tpu_custom_call.1} parent=11 // pred_check_branch
        %243 = sbr.rel (%p241) target = $region24
      $region23: #{tpu_custom_call.1} parent=11 // pred_region
        _
      $region24: #{tpu_custom_call.1} parent=11 // pred_fallthru
        _
      // Predicated region
      $region25: #{tpu_custom_call.1} parent=11 // pred_check
        %p244 = pneg %p152
      $region26: #{tpu_custom_call.1} parent=11 // pred_check_branch
        %246 = sbr.rel (%p244) target = $region28
      $region27: #{tpu_custom_call.1} parent=11 // pred_region
        _
      $region28: #{tpu_custom_call.1} parent=11 // pred_fallthru
        _
      // Predicated region
      $region29: #{tpu_custom_call.1} parent=11 // pred_check
        %p247 = pneg %p173
      $region30: #{tpu_custom_call.1} parent=11 // pred_check_branch
        %249 = sbr.rel (%p247) target = $region32
      $region31: #{tpu_custom_call.1} parent=11 // pred_region
        _
      $region32: #{tpu_custom_call.1} parent=11 // pred_fallthru
        _
      // Predicated region
      $region33: #{tpu_custom_call.1} parent=11 // pred_check
        %p250 = pneg %p194
      $region34: #{tpu_custom_call.1} parent=11 // pred_check_branch
        %252 = sbr.rel (%p250) target = $region36
      $region35: #{tpu_custom_call.1} parent=11 // pred_region
        _
      $region36: #{tpu_custom_call.1} parent=11 // pred_fallthru
        _
    $region12: #{tpu_custom_call.1} parent=5 // pred_fallthru
      _
    %p253 = scmp.lt.s32.totalorder %s16, 2
    // Predicated region
    $region37: #{tpu_custom_call.1} parent=5 // pred_check
      %p254 = pneg %p253
    $region38: #{tpu_custom_call.1} parent=5 // pred_check_branch
      %256 = sbr.rel (%p254) target = $region40
    $region39: #{tpu_custom_call.1} parent=5 // pred_region
      // Predicated region
      $region41: #{tpu_custom_call.1} parent=39 // pred_check
        %p257 = pneg %p36
      $region42: #{tpu_custom_call.1} parent=39 // pred_check_branch
        %259 = sbr.rel (%p257) target = $region44
      $region43: #{tpu_custom_call.1} parent=39 // pred_region
        %p260 = scmp.lt.s32.totalorder %s16, 1
        %s261 = scalar_select %p260, %s16, 1
        %s262 = smul.addr %s261, 2
        %s263 = smul.addr %s262, 8
        %s264 = scalar_lea.vmem %s0, %s263
      $region44: #{tpu_custom_call.1} parent=39 // pred_fallthru
        _
      // Predicated region
      $region45: #{tpu_custom_call.1} parent=39 // pred_check
        %p265 = pneg %p62
      $region46: #{tpu_custom_call.1} parent=39 // pred_check_branch
        %267 = sbr.rel (%p265) target = $region48
      $region47: #{tpu_custom_call.1} parent=39 // pred_region
        %p268 = scmp.lt.s32.totalorder %s16, 1
        %s269 = scalar_select %p268, %s16, 1
        %s270 = smul.addr %s269, 2
        %s271 = smul.addr %s270, 8
        %s272 = scalar_lea.vmem %s1, %s271
      $region48: #{tpu_custom_call.1} parent=39 // pred_fallthru
        _
    $region40: #{tpu_custom_call.1} parent=5 // pred_fallthru
      _
    %p273 = scmp.le.s32.totalorder 1, %s16
    %p274 = scmp.lt.s32.totalorder %s16, 3
    %p275 = pnand %p273, %p274
    %p276 = pneg %p275
    // Predicated region
    $region49: #{tpu_custom_call.1} parent=5 // pred_check
      _
    $region50: #{tpu_custom_call.1} parent=5 // pred_check_branch
      %278 = sbr.rel (%p275) target = $region52
    $region51: #{tpu_custom_call.1} parent=5 // pred_region
      %s279 = ssub.s32 %s16, 1
      %p280 = scmp.lt.s32.totalorder %s21, 1
      %s281 = scalar_select %p280, %s21, 1
      %s282 = smul.addr %s281, 2
      %s283 = smul.addr %s282, 8
      %s284 = scalar_lea.vmem %s0, %s283
      %p285 = pneg %p42
      %p286 = pneg %p39
      %p287 = scmp.lt.s32.totalorder %s21, 1
      %s288 = scalar_select %p287, %s21, 1
      %s289 = smul.addr %s288, 2
      %s290 = smul.addr %s289, 8
      %s291 = scalar_lea.vmem %s1, %s290
      %p292 = pneg %p68
      %p293 = pneg %p65
      %p294 = pneg %p89
      %p295 = pneg %p86
      %p296 = pneg %p110
      %p297 = pneg %p107
      %p298 = pneg %p131
      %p299 = pneg %p128
      %p300 = pneg %p152
      %p301 = pneg %p149
      %p302 = pneg %p173
      %p303 = pneg %p170
      %p304 = pneg %p194
      %p305 = pneg %p191
      %p306 = pneg %p220
      %p307 = pneg %p217
      %p308 = scmp.lt.s32.totalorder %s21, 1
      %s309 = scalar_select %p308, %s21, 1
      %s310 = smul.addr %s309, 2
      %s311 = smul.addr %s310, 8
      %s312 = scalar_lea.vmem %s8, %s311
      %p313 = scmp.lt.s32.totalorder %s21, 1
      %s314 = scalar_select %p313, %s21, 1
      %s315 = smul.addr %s314, 2
      %s316 = smul.addr %s315, 8
      %s317 = scalar_lea.vmem %s0, %s316
      %p318 = scmp.lt.s32.totalorder %s21, 1
      %s319 = scalar_select %p318, %s21, 1
      %s320 = smul.addr %s319, 2
      %s321 = smul.addr %s320, 8
      %s322 = scalar_lea.vmem %s1, %s321
      %p323 = scmp.lt.s32.totalorder %s21, 1
      %s324 = scalar_select %p323, %s21, 1
      %s325 = smul.addr %s324, 2
      %s326 = smul.addr %s325, 8
      %s327 = scalar_lea.vmem %s8, %s326
      %v328 = vld [vmem:[%s317] sm:$0xff]
      %v329 = vld [vmem:[%s317 + $0x8] sm:$0xff]
      %v330 = vld [vmem:[%s322] sm:$0xff]
      %v331 = vld [vmem:[%s322 + $0x8] sm:$0xff]
      %v332 = vld [vmem:[%s2] sm:$0xf]
      %v333 = vld [vmem:[%s3] sm:$0x1]
      %vm334 = vcmask 130048
      %v336 = vsel %vm334, %v328, 0
      %v339 = vsel %vm334, %v329, 0
      %341 = vmatpush.msra.mxu0 0.0
      %342 = vmatpush.msra.mxu0 0.0
      %343 = vmatpush.msra.mxu0 0.0
      %344 = vmatpush.msra.mxu0 0.0
      %345 = vmatpush.msra.mxu0 0.0
      %346 = vmatpush.msra.mxu0 0.0
      %347 = vmatpush.msra.mxu0 0.0
      %348 = vmatpush.msra.mxu0 0.0
      %349 = vmatpush.msra.mxu0 0.0
      %350 = vmatpush.msra.mxu0 0.0
      %351 = vmatpush.msra.mxu0 0.0
      %352 = vmatpush.msra.mxu0 0.0
      %353 = vmatpush.msra.mxu0 0.0
      %354 = vmatpush.msra.mxu0 0.0
      %355 = vmatpush.msra.mxu0 %v331
      %356 = vmatpush.msra.mxu0 %v330
      %357 = vmatmul.f32.gmra.mxu0 %v336
      %v358 = vpop.f32.mrf.mxu0
      %v359 = vadd.f32 0.0, %v358
      %360 = vmatmul.f32.gmra.mxu0 %v339
      %v361 = vpop.f32.mrf.mxu0
      %v362 = vadd.f32 0.0, %v361
      %363 = vdwg.mxu0
      %v365 = vperm.slane %v333, 0
      %vm367 = vcmask 31744
      %v369 = vsel %vm367, %v359, 0
      %v372 = vsel %vm367, %v362, 0
      %vm374 = vcmask 1043456
      %v376 = vsel %vm374, %v332, 0
      %378 = vmatpush.msra.mxu0 0.0
      %379 = vmatpush.msra.mxu0 0.0
      %380 = vmatpush.msra.mxu0 0.0
      %381 = vmatpush.msra.mxu0 0.0
      %382 = vmatpush.msra.mxu0 0.0
      %383 = vmatpush.msra.mxu0 0.0
      %384 = vmatpush.msra.mxu0 0.0
      %385 = vmatpush.msra.mxu0 0.0
      %386 = vmatpush.msra.mxu0 0.0
      %387 = vmatpush.msra.mxu0 0.0
      %388 = vmatpush.msra.mxu0 0.0
      %389 = vmatpush.msra.mxu0 0.0
      %390 = vmatpush.msra.mxu0 0.0
      %391 = vmatpush.msra.mxu0 0.0
      %392 = vmatpush.msra.mxu0 0.0
      %393 = vmatpush.msra.mxu0 %v376
      %394 = vmatmul.f32.gmra.mxu0 %v369
      %v395 = vpop.f32.mrf.mxu0
      %v396 = vadd.f32 %v365, %v395
      %397 = vmatmul.f32.gmra.mxu0 %v372
      %v398 = vpop.f32.mrf.mxu0
      %v399 = vadd.f32 %v365, %v398
      %400 = vdwg.mxu0
      %vm401 = vcmp.gt.f32.partialorder %v396, 0.0
      %vm402 = vcmp.gt.f32.partialorder %v399, 0.0
      %v403 = vmul.f32 %v396, 1.442695
      %v404 = vpow.pop %v403
      %v405 = vmul.f32 %v399, 1.442695
      %v406 = vpow.pop %v405
      %v407 = vsub.f32 %v404, 1.0
      %v408 = vsub.f32 %v406, 1.0
      %v409 = vsel %vm401, %v396, %v407
      %v410 = vsel %vm402, %v399, %v408
      %v411 = vld [vmem:[%s4] sm:$0xff]
      %v412 = vld [vmem:[%s4 + $0x8] sm:$0xff]
      %v413 = vld [vmem:[%s4 + $0x10] sm:$0xff]
      %v414 = vld [vmem:[%s4 + $0x18] sm:$0xff]
      %v415 = vld [vmem:[%s5] sm:$0x1]
      %416 = vmatpush.msra.mxu0 0.0
      %417 = vmatpush.msra.mxu0 0.0
      %418 = vmatpush.msra.mxu0 0.0
      %419 = vmatpush.msra.mxu0 0.0
      %420 = vmatpush.msra.mxu0 0.0
      %421 = vmatpush.msra.mxu0 0.0
      %422 = vmatpush.msra.mxu0 0.0
      %423 = vmatpush.msra.mxu0 0.0
      %424 = vmatpush.msra.mxu0 0.0
      %425 = vmatpush.msra.mxu0 0.0
      %426 = vmatpush.msra.mxu0 0.0
      %427 = vmatpush.msra.mxu0 0.0
      %428 = vmatpush.msra.mxu0 0.0
      %429 = vmatpush.msra.mxu0 0.0
      %430 = vmatpush.msra.mxu0 %v410
      %431 = vmatpush.msra.mxu0 %v409
      %432 = vmatmul.f32.gmra.mxu0 %v336
      %v433 = vpop.f32.mrf.mxu0
      %v434 = vadd.f32 0.0, %v433
      %435 = vmatmul.f32.gmra.mxu0 %v339
      %v436 = vpop.f32.mrf.mxu0
      %v437 = vadd.f32 0.0, %v436
      %438 = vdwg.mxu0
      %v440 = vperm.slane %v415, 0
      %vm442 = vcmask 261120
      %v444 = vsel %vm442, %v434, 0
      %v447 = vsel %vm442, %v437, 0
      %449 = vmatpush.msra.mxu0 0.0
      %450 = vmatpush.msra.mxu0 0.0
      %451 = vmatpush.msra.mxu0 0.0
      %452 = vmatpush.msra.mxu0 0.0
      %453 = vmatpush.msra.mxu0 0.0
      %454 = vmatpush.msra.mxu0 0.0
      %455 = vmatpush.msra.mxu0 0.0
      %456 = vmatpush.msra.mxu0 0.0
      %457 = vmatpush.msra.mxu0 0.0
      %458 = vmatpush.msra.mxu0 0.0
      %459 = vmatpush.msra.mxu0 0.0
      %460 = vmatpush.msra.mxu0 0.0
      %461 = vmatpush.msra.mxu0 %v414
      %462 = vmatpush.msra.mxu0 %v413
      %463 = vmatpush.msra.mxu0 %v412
      %464 = vmatpush.msra.mxu0 %v411
      %465 = vmatmul.f32.gmra.mxu0 %v444
      %v466 = vpop.f32.mrf.mxu0
      %v467 = vadd.f32 %v440, %v466
      %468 = vmatmul.f32.gmra.mxu0 %v447
      %v469 = vpop.f32.mrf.mxu0
      %v470 = vadd.f32 %v440, %v469
      %471 = vdwg.mxu0
      %vm472 = vcmp.gt.f32.partialorder %v467, 0.0
      %vm473 = vcmp.gt.f32.partialorder %v470, 0.0
      %v474 = vmul.f32 %v467, 1.442695
      %v475 = vpow.pop %v474
      %v476 = vmul.f32 %v470, 1.442695
      %v477 = vpow.pop %v476
      %v478 = vsub.f32 %v475, 1.0
      %v479 = vsub.f32 %v477, 1.0
      %v480 = vsel %vm472, %v467, %v478
      %v481 = vsel %vm473, %v470, %v479
      %v482 = vld [vmem:[%s6] sm:$0xff]
      %v483 = vld [vmem:[%s6 + $0x8] sm:$0xff]
      %v484 = vld [vmem:[%s6 + $0x10] sm:$0xff]
      %v485 = vld [vmem:[%s6 + $0x18] sm:$0xff]
      %v486 = vld [vmem:[#allocation2] sm:$0x1]
      %v488 = vperm.slane %v486, 0
      %v491 = vsel %vm442, %v480, 0
      %v494 = vsel %vm442, %v481, 0
      %496 = vmatpush.msra.mxu0 0.0
      %497 = vmatpush.msra.mxu0 0.0
      %498 = vmatpush.msra.mxu0 0.0
      %499 = vmatpush.msra.mxu0 0.0
      %500 = vmatpush.msra.mxu0 0.0
      %501 = vmatpush.msra.mxu0 0.0
      %502 = vmatpush.msra.mxu0 0.0
      %503 = vmatpush.msra.mxu0 0.0
      %504 = vmatpush.msra.mxu0 0.0
      %505 = vmatpush.msra.mxu0 0.0
      %506 = vmatpush.msra.mxu0 0.0
      %507 = vmatpush.msra.mxu0 0.0
      %508 = vmatpush.msra.mxu0 %v485
      %509 = vmatpush.msra.mxu0 %v484
      %510 = vmatpush.msra.mxu0 %v483
      %511 = vmatpush.msra.mxu0 %v482
      %512 = vmatmul.f32.gmra.mxu0 %v491
      %v513 = vpop.f32.mrf.mxu0
      %v514 = vadd.f32 %v488, %v513
      %515 = vmatmul.f32.gmra.mxu0 %v494
      %v516 = vpop.f32.mrf.mxu0
      %v517 = vadd.f32 %v488, %v516
      %518 = vdwg.mxu0
      %vm519 = vcmask 7168
      %520 = vst.msk [vmem:[%s327] sm:$0xff] %vm519, %v514
      %521 = vst.msk [vmem:[%s327 + $0x8] sm:$0xff] %vm519, %v517
      %p522 = scmp.lt.s32.totalorder %s21, 1
      %s523 = scalar_select %p522, %s21, 1
      %s524 = smul.addr %s523, 2
      %s525 = smul.addr %s524, 8
      %s526 = scalar_lea.vmem %s8, %s525
      // Predicated region
      $region53: #{tpu_custom_call.1} parent=51 // pred_check
        %p527 = pneg %p217
      $region54: #{tpu_custom_call.1} parent=51 // pred_check_branch
        %529 = sbr.rel (%p527) target = $region56
      $region55: #{tpu_custom_call.1} parent=51 // pred_region
        _
      $region56: #{tpu_custom_call.1} parent=51 // pred_fallthru
        _
    $region52: #{tpu_custom_call.1} parent=5 // pred_fallthru
      _
    %p530 = scmp.le.s32.totalorder 2, %s16
    // Predicated region
    $region57: #{tpu_custom_call.1} parent=5 // pred_check
      %p531 = pneg %p530
    $region58: #{tpu_custom_call.1} parent=5 // pred_check_branch
      %533 = sbr.rel (%p531) target = $region60
    $region59: #{tpu_custom_call.1} parent=5 // pred_region
      %s534 = ssub.s32 %s16, 2
      // Predicated region
      $region61: #{tpu_custom_call.1} parent=59 // pred_check
        %p535 = pneg %p223
      $region62: #{tpu_custom_call.1} parent=59 // pred_check_branch
        %537 = sbr.rel (%p535) target = $region64
      $region63: #{tpu_custom_call.1} parent=59 // pred_region
        %p538 = scmp.lt.s32.totalorder %s22, 1
        %s539 = scalar_select %p538, %s22, 1
        %s540 = smul.addr %s539, 2
        %s541 = smul.addr %s540, 8
        %s542 = scalar_lea.vmem %s8, %s541
      $region64: #{tpu_custom_call.1} parent=59 // pred_fallthru
        _
    $region60: #{tpu_custom_call.1} parent=5 // pred_fallthru
      _
  $region6: #{tpu_custom_call.1} parent=0 // loop_footer
    %s20 = sadd.s32 1, %s16
  $region7: #{tpu_custom_call.1} parent=0 // loop_footer_branch
    %15 = sbr.rel target = $region3
  $region8: #{tpu_custom_call.1} parent=0 // loop_exit
    _

</llo_original>
